<compile_context>
chip_gen: v5e
topology: v5e:2x2
jax: 0.10.0
libtpu: 0.0.40
codegen_flags: <defaults>
</compile_context>

<pallas_src>
import math

import jax
import jax.numpy as jnp
from jax.experimental import pallas as pl
from jax.experimental.pallas import tpu as pltpu


# ---------------------------------------------------------------------------
# kernelActivation: RBF expansion + per-channel linear combination (hot path)
# ---------------------------------------------------------------------------
def _make_rbf_kernel(dict_scaled, n_basis):
    # dict_scaled: tuple of python floats, sqrt(gamma) * dict[k] (compile-time).
    def kernel(x_ref, w_ref, o_ref):
        x = x_ref[...].astype(jnp.float32)        # (TB, TC), pre-scaled by sqrt(gamma)
        w = w_ref[...].astype(jnp.float32)        # (K,  TC), lane-dense weight rows
        acc = jnp.zeros(x.shape, jnp.float32)
        for k in range(n_basis):                  # K=20: fully unrolled
            diff = x - dict_scaled[k]             # scalar constant, VPU sub
            acc = acc + jnp.exp(-(diff * diff)) * w[k]   # EUP exp + VPU fma
        o_ref[...] = acc.astype(o_ref.dtype)

    return kernel


def kernel_activation(x, weight_t, dict_scaled, sqrt_gamma):
    """x: (B, C); weight_t: (K, C) = conv weight transposed; returns (B, C)."""
    B, C = x.shape
    K = weight_t.shape[0]

    # Tile sizes: lane-dense (multiple of 128 channels, multiple of 8 rows),
    # sized well under the v7x 64 MiB VMEM / 32 MiB scoped default
    # (256*512*4 B = 512 KiB per tile, double-buffered).
    TC = min(512, pl.cdiv(C, 128) * 128)
    TB = min(256, pl.cdiv(B, 8) * 8)
    C_pad = pl.cdiv(C, TC) * TC
    B_pad = pl.cdiv(B, TB) * TB

    # Fold gamma into the input once per call; pad to lane/sublane-dense shape.
    xs = (x.astype(jnp.float32) * jnp.float32(sqrt_gamma))
    xs = jnp.pad(xs, ((0, B_pad - B), (0, C_pad - C)))
    w = jnp.pad(weight_t.astype(jnp.float32), ((0, 0), (0, C_pad - C)))  # (K, C_pad)

    grid = (B_pad // TB, C_pad // TC)
    cost = pl.CostEstimate(
        flops=5 * B_pad * C_pad * K,
        transcendentals=B_pad * C_pad * K,
        bytes_accessed=4 * (2 * B_pad * C_pad + K * C_pad),
    )

    out = pl.pallas_call(
        _make_rbf_kernel(dict_scaled, K),
        out_shape=jax.ShapeDtypeStruct((B_pad, C_pad), x.dtype),
        grid_spec=pltpu.PrefetchScalarGridSpec(
            num_scalar_prefetch=0,
            grid=grid,
            in_specs=[
                pl.BlockSpec((TB, TC), lambda i, j: (i, j)),   # x tile
                pl.BlockSpec((K, TC), lambda i, j: (0, j)),    # weight rows (bcast over batch)
            ],
            out_specs=pl.BlockSpec((TB, TC), lambda i, j: (i, j)),
        ),
        compiler_params=pltpu.CompilerParams(
            dimension_semantics=("parallel", "parallel"),
        ),
        cost_estimate=cost,
    )(xs, w)
    return out[:B, :C]


# ---------------------------------------------------------------------------
# relu / gelu: tiled elementwise kernels (lane-dense, pipelined)
# ---------------------------------------------------------------------------
def _relu_kernel(x_ref, o_ref):
    o_ref[...] = jnp.maximum(x_ref[...], 0)


def _gelu_kernel(x_ref, o_ref):
    # F.gelu default in PyTorch is the exact (erf-based) GELU.
    o_ref[...] = jax.nn.gelu(x_ref[...], approximate=False)


_EW_LANES = 512   # large multiple of 128 -> unmasked vector stores
_EW_ROWS = 256    # 256*512*4 B = 512 KiB per tile; fits all generations


def _elementwise(kern, x):
    orig_shape = x.shape
    n = x.size
    rows = pl.cdiv(n, _EW_LANES)
    tr = min(_EW_ROWS, pl.cdiv(rows, 8) * 8)
    rows_p = pl.cdiv(rows, tr) * tr
    xf = jnp.pad(x.reshape(-1), (0, rows_p * _EW_LANES - n)).reshape(rows_p, _EW_LANES)

    y = pl.pallas_call(
        kern,
        out_shape=jax.ShapeDtypeStruct((rows_p, _EW_LANES), x.dtype),
        grid_spec=pltpu.PrefetchScalarGridSpec(
            num_scalar_prefetch=0,
            grid=(rows_p // tr,),
            in_specs=[pl.BlockSpec((tr, _EW_LANES), lambda i: (i, 0))],
            out_specs=pl.BlockSpec((tr, _EW_LANES), lambda i: (i, 0)),
        ),
        compiler_params=pltpu.CompilerParams(dimension_semantics=("parallel",)),
    )(xf)
    return y.reshape(-1)[:n].reshape(orig_shape)


# ---------------------------------------------------------------------------
# Activation wrapper (mirrors the PyTorch module)
# ---------------------------------------------------------------------------
class Activation:
    def __init__(self, activation_func, filters, n_basis=20, span=4, key=None):
        self.activation_func = activation_func
        if activation_func == "kernel":
            self.channels = filters
            self.n_basis = n_basis
            self.dict = jnp.linspace(-span, span, n_basis).astype(jnp.float32)
            self.gamma = 1.0 / (6.0 * float(self.dict[-1] - self.dict[-2]) ** 2)
            # Conv1d(channels*n_basis, channels, kernel_size=(1,1), groups=channels,
            #        bias=False) -> weight (channels, n_basis, 1, 1); deterministic
            # kaiming-uniform-style init (bound = 1/sqrt(fan_in)).
            key = jax.random.PRNGKey(0) if key is None else key
            bound = 1.0 / math.sqrt(n_basis)
            self.weight = jax.random.uniform(
                key, (filters, n_basis), minval=-bound, maxval=bound,
                dtype=jnp.float32,
            )
            # Kernel-friendly precomputations:
            self.sqrt_gamma = math.sqrt(self.gamma)
            self.dict_scaled = tuple(
                float(v) * self.sqrt_gamma for v in jax.device_get(self.dict)
            )
            self.weight_t = jnp.transpose(self.weight)          # (K, C)

    def __call__(self, x):
        if self.activation_func == "relu":
            return _elementwise(_relu_kernel, x)
        elif self.activation_func == "gelu":
            return _elementwise(_gelu_kernel, x)
        elif self.activation_func == "kernel":
            # TODO(synk): for tiny activations (a few thousand elems) the
            # pallas_call is launch-overhead dominated; in a real model fuse
            # this into the adjacent layer's kernel instead.
            return kernel_activation(x, self.weight_t, self.dict_scaled,
                                     self.sqrt_gamma)
        raise ValueError(self.activation_func)


if __name__ == "__main__":
    key = jax.random.PRNGKey(0)
    kx, kw = jax.random.split(key)

    B, C = 8, 32  # batch, channels (filters)
    x = jax.random.normal(kx, (B, C), dtype=jnp.float32)

    # 'kernel' activation (the kernelActivation module)
    act = Activation("kernel", filters=C, key=kw)
    y = jax.block_until_ready(act(x))

    # pure-JAX reference check of the Pallas result
    phi = jnp.exp(-act.gamma * (x[:, :, None] - act.dict[None, None, :]) ** 2)
    ref = jnp.sum(phi * act.weight[None, :, :], axis=-1)
    assert y.shape == (B, C) and y.dtype == x.dtype
    assert jnp.allclose(y, ref, atol=1e-5, rtol=1e-5)

    # also exercise the relu / gelu branches
    y_relu = jax.block_until_ready(Activation("relu", C)(x))
    y_gelu = jax.block_until_ready(Activation("gelu", C)(x))
    assert jnp.allclose(y_relu, jnp.maximum(x, 0), atol=1e-6)
    assert jnp.allclose(y_gelu, jax.nn.gelu(x, approximate=False), atol=1e-5)

    print("KERNEL_OK")
</pallas_src>

<mosaic_0001>
module attributes {stable_mosaic.version = 11 : i64} {
  func.func @kernel(%arg0: i32, %arg1: i32, %arg2: memref<8x128xf32, #tpu.memory_space<vmem>>, %arg3: memref<20x128xf32, #tpu.memory_space<vmem>>, %arg4: memref<8x128xf32, #tpu.memory_space<vmem>>) attributes {dimension_semantics = [#tpu.dimension_semantics<parallel>, #tpu.dimension_semantics<parallel>], iteration_bounds = array<i64: 1, 1>, scalar_prefetch = 0 : i64, scratch_operands = 0 : i64, tpu.core_type = #tpu.core_type<tc>, window_params = [{transform_indices = @transform_0, window_bounds = array<i64: 8, 128>}, {transform_indices = @transform_1, window_bounds = array<i64: 20, 128>}, {transform_indices = @transform_2, window_bounds = array<i64: 8, 128>}]} {
    %c0 = arith.constant 0 : index
    %c0_0 = arith.constant 0 : index
    %0 = vector.load %arg2[%c0, %c0_0] : memref<8x128xf32, #tpu.memory_space<vmem>>, vector<8x128xf32>
    %c0_1 = arith.constant 0 : index
    %c0_2 = arith.constant 0 : index
    %1 = vector.load %arg3[%c0_1, %c0_2] : memref<20x128xf32, #tpu.memory_space<vmem>>, vector<20x128xf32>
    %cst = arith.constant 0.000000e+00 : f32
    %2 = vector.broadcast %cst : f32 to vector<8x128xf32>
    %cst_3 = arith.constant -3.87836027 : f32
    %3 = vector.broadcast %cst_3 : f32 to vector<8x128xf32>
    %4 = arith.subf %0, %3 : vector<8x128xf32>
    %5 = arith.mulf %4, %4 : vector<8x128xf32>
    %cst_4 = arith.constant 0.000000e+00 : f32
    %6 = vector.broadcast %cst_4 : f32 to vector<8x128xf32>
    %7 = arith.subf %6, %5 : vector<8x128xf32>
    %8 = math.exp %7 : vector<8x128xf32>
    %9 = vector.extract_strided_slice %1 {offsets = [0, 0], sizes = [1, 128], strides = [1, 1]} : vector<20x128xf32> to vector<1x128xf32>
    %10 = vector.shape_cast %9 : vector<1x128xf32> to vector<128xf32>
    %11 = vector.shape_cast %10 : vector<128xf32> to vector<1x128xf32>
    %12 = vector.broadcast %11 : vector<1x128xf32> to vector<8x128xf32>
    %13 = arith.mulf %8, %12 : vector<8x128xf32>
    %14 = arith.addf %2, %13 : vector<8x128xf32>
    %cst_5 = arith.constant -3.47011209 : f32
    %15 = vector.broadcast %cst_5 : f32 to vector<8x128xf32>
    %16 = arith.subf %0, %15 : vector<8x128xf32>
    %17 = arith.mulf %16, %16 : vector<8x128xf32>
    %cst_6 = arith.constant 0.000000e+00 : f32
    %18 = vector.broadcast %cst_6 : f32 to vector<8x128xf32>
    %19 = arith.subf %18, %17 : vector<8x128xf32>
    %20 = math.exp %19 : vector<8x128xf32>
    %21 = vector.extract_strided_slice %1 {offsets = [1, 0], sizes = [1, 128], strides = [1, 1]} : vector<20x128xf32> to vector<1x128xf32>
    %22 = vector.shape_cast %21 : vector<1x128xf32> to vector<128xf32>
    %23 = vector.shape_cast %22 : vector<128xf32> to vector<1x128xf32>
    %24 = vector.broadcast %23 : vector<1x128xf32> to vector<8x128xf32>
    %25 = arith.mulf %20, %24 : vector<8x128xf32>
    %26 = arith.addf %14, %25 : vector<8x128xf32>
    %cst_7 = arith.constant -3.06186342 : f32
    %27 = vector.broadcast %cst_7 : f32 to vector<8x128xf32>
    %28 = arith.subf %0, %27 : vector<8x128xf32>
    %29 = arith.mulf %28, %28 : vector<8x128xf32>
    %cst_8 = arith.constant 0.000000e+00 : f32
    %30 = vector.broadcast %cst_8 : f32 to vector<8x128xf32>
    %31 = arith.subf %30, %29 : vector<8x128xf32>
    %32 = math.exp %31 : vector<8x128xf32>
    %33 = vector.extract_strided_slice %1 {offsets = [2, 0], sizes = [1, 128], strides = [1, 1]} : vector<20x128xf32> to vector<1x128xf32>
    %34 = vector.shape_cast %33 : vector<1x128xf32> to vector<128xf32>
    %35 = vector.shape_cast %34 : vector<128xf32> to vector<1x128xf32>
    %36 = vector.broadcast %35 : vector<1x128xf32> to vector<8x128xf32>
    %37 = arith.mulf %32, %36 : vector<8x128xf32>
    %38 = arith.addf %26, %37 : vector<8x128xf32>
    %cst_9 = arith.constant -2.653615 : f32
    %39 = vector.broadcast %cst_9 : f32 to vector<8x128xf32>
    %40 = arith.subf %0, %39 : vector<8x128xf32>
    %41 = arith.mulf %40, %40 : vector<8x128xf32>
    %cst_10 = arith.constant 0.000000e+00 : f32
    %42 = vector.broadcast %cst_10 : f32 to vector<8x128xf32>
    %43 = arith.subf %42, %41 : vector<8x128xf32>
    %44 = math.exp %43 : vector<8x128xf32>
    %45 = vector.extract_strided_slice %1 {offsets = [3, 0], sizes = [1, 128], strides = [1, 1]} : vector<20x128xf32> to vector<1x128xf32>
    %46 = vector.shape_cast %45 : vector<1x128xf32> to vector<128xf32>
    %47 = vector.shape_cast %46 : vector<128xf32> to vector<1x128xf32>
    %48 = vector.broadcast %47 : vector<1x128xf32> to vector<8x128xf32>
    %49 = arith.mulf %44, %48 : vector<8x128xf32>
    %50 = arith.addf %38, %49 : vector<8x128xf32>
    %cst_11 = arith.constant -2.24536633 : f32
    %51 = vector.broadcast %cst_11 : f32 to vector<8x128xf32>
    %52 = arith.subf %0, %51 : vector<8x128xf32>
    %53 = arith.mulf %52, %52 : vector<8x128xf32>
    %cst_12 = arith.constant 0.000000e+00 : f32
    %54 = vector.broadcast %cst_12 : f32 to vector<8x128xf32>
    %55 = arith.subf %54, %53 : vector<8x128xf32>
    %56 = math.exp %55 : vector<8x128xf32>
    %57 = vector.extract_strided_slice %1 {offsets = [4, 0], sizes = [1, 128], strides = [1, 1]} : vector<20x128xf32> to vector<1x128xf32>
    %58 = vector.shape_cast %57 : vector<1x128xf32> to vector<128xf32>
    %59 = vector.shape_cast %58 : vector<128xf32> to vector<1x128xf32>
    %60 = vector.broadcast %59 : vector<1x128xf32> to vector<8x128xf32>
    %61 = arith.mulf %56, %60 : vector<8x128xf32>
    %62 = arith.addf %50, %61 : vector<8x128xf32>
    %cst_13 = arith.constant -1.83711803 : f32
    %63 = vector.broadcast %cst_13 : f32 to vector<8x128xf32>
    %64 = arith.subf %0, %63 : vector<8x128xf32>
    %65 = arith.mulf %64, %64 : vector<8x128xf32>
    %cst_14 = arith.constant 0.000000e+00 : f32
    %66 = vector.broadcast %cst_14 : f32 to vector<8x128xf32>
    %67 = arith.subf %66, %65 : vector<8x128xf32>
    %68 = math.exp %67 : vector<8x128xf32>
    %69 = vector.extract_strided_slice %1 {offsets = [5, 0], sizes = [1, 128], strides = [1, 1]} : vector<20x128xf32> to vector<1x128xf32>
    %70 = vector.shape_cast %69 : vector<1x128xf32> to vector<128xf32>
    %71 = vector.shape_cast %70 : vector<128xf32> to vector<1x128xf32>
    %72 = vector.broadcast %71 : vector<1x128xf32> to vector<8x128xf32>
    %73 = arith.mulf %68, %72 : vector<8x128xf32>
    %74 = arith.addf %62, %73 : vector<8x128xf32>
    %cst_15 = arith.constant -1.42886972 : f32
    %75 = vector.broadcast %cst_15 : f32 to vector<8x128xf32>
    %76 = arith.subf %0, %75 : vector<8x128xf32>
    %77 = arith.mulf %76, %76 : vector<8x128xf32>
    %cst_16 = arith.constant 0.000000e+00 : f32
    %78 = vector.broadcast %cst_16 : f32 to vector<8x128xf32>
    %79 = arith.subf %78, %77 : vector<8x128xf32>
    %80 = math.exp %79 : vector<8x128xf32>
    %81 = vector.extract_strided_slice %1 {offsets = [6, 0], sizes = [1, 128], strides = [1, 1]} : vector<20x128xf32> to vector<1x128xf32>
    %82 = vector.shape_cast %81 : vector<1x128xf32> to vector<128xf32>
    %83 = vector.shape_cast %82 : vector<128xf32> to vector<1x128xf32>
    %84 = vector.broadcast %83 : vector<1x128xf32> to vector<8x128xf32>
    %85 = arith.mulf %80, %84 : vector<8x128xf32>
    %86 = arith.addf %74, %85 : vector<8x128xf32>
    %cst_17 = arith.constant -1.02062106 : f32
    %87 = vector.broadcast %cst_17 : f32 to vector<8x128xf32>
    %88 = arith.subf %0, %87 : vector<8x128xf32>
    %89 = arith.mulf %88, %88 : vector<8x128xf32>
    %cst_18 = arith.constant 0.000000e+00 : f32
    %90 = vector.broadcast %cst_18 : f32 to vector<8x128xf32>
    %91 = arith.subf %90, %89 : vector<8x128xf32>
    %92 = math.exp %91 : vector<8x128xf32>
    %93 = vector.extract_strided_slice %1 {offsets = [7, 0], sizes = [1, 128], strides = [1, 1]} : vector<20x128xf32> to vector<1x128xf32>
    %94 = vector.shape_cast %93 : vector<1x128xf32> to vector<128xf32>
    %95 = vector.shape_cast %94 : vector<128xf32> to vector<1x128xf32>
    %96 = vector.broadcast %95 : vector<1x128xf32> to vector<8x128xf32>
    %97 = arith.mulf %92, %96 : vector<8x128xf32>
    %98 = arith.addf %86, %97 : vector<8x128xf32>
    %cst_19 = arith.constant -0.612372696 : f32
    %99 = vector.broadcast %cst_19 : f32 to vector<8x128xf32>
    %100 = arith.subf %0, %99 : vector<8x128xf32>
    %101 = arith.mulf %100, %100 : vector<8x128xf32>
    %cst_20 = arith.constant 0.000000e+00 : f32
    %102 = vector.broadcast %cst_20 : f32 to vector<8x128xf32>
    %103 = arith.subf %102, %101 : vector<8x128xf32>
    %104 = math.exp %103 : vector<8x128xf32>
    %105 = vector.extract_strided_slice %1 {offsets = [8, 0], sizes = [1, 128], strides = [1, 1]} : vector<20x128xf32> to vector<1x128xf32>
    %106 = vector.shape_cast %105 : vector<1x128xf32> to vector<128xf32>
    %107 = vector.shape_cast %106 : vector<128xf32> to vector<1x128xf32>
    %108 = vector.broadcast %107 : vector<1x128xf32> to vector<8x128xf32>
    %109 = arith.mulf %104, %108 : vector<8x128xf32>
    %110 = arith.addf %98, %109 : vector<8x128xf32>
    %cst_21 = arith.constant -0.204124287 : f32
    %111 = vector.broadcast %cst_21 : f32 to vector<8x128xf32>
    %112 = arith.subf %0, %111 : vector<8x128xf32>
    %113 = arith.mulf %112, %112 : vector<8x128xf32>
    %cst_22 = arith.constant 0.000000e+00 : f32
    %114 = vector.broadcast %cst_22 : f32 to vector<8x128xf32>
    %115 = arith.subf %114, %113 : vector<8x128xf32>
    %116 = math.exp %115 : vector<8x128xf32>
    %117 = vector.extract_strided_slice %1 {offsets = [9, 0], sizes = [1, 128], strides = [1, 1]} : vector<20x128xf32> to vector<1x128xf32>
    %118 = vector.shape_cast %117 : vector<1x128xf32> to vector<128xf32>
    %119 = vector.shape_cast %118 : vector<128xf32> to vector<1x128xf32>
    %120 = vector.broadcast %119 : vector<1x128xf32> to vector<8x128xf32>
    %121 = arith.mulf %116, %120 : vector<8x128xf32>
    %122 = arith.addf %110, %121 : vector<8x128xf32>
    %cst_23 = arith.constant 0.204124317 : f32
    %123 = vector.broadcast %cst_23 : f32 to vector<8x128xf32>
    %124 = arith.subf %0, %123 : vector<8x128xf32>
    %125 = arith.mulf %124, %124 : vector<8x128xf32>
    %cst_24 = arith.constant 0.000000e+00 : f32
    %126 = vector.broadcast %cst_24 : f32 to vector<8x128xf32>
    %127 = arith.subf %126, %125 : vector<8x128xf32>
    %128 = math.exp %127 : vector<8x128xf32>
    %129 = vector.extract_strided_slice %1 {offsets = [10, 0], sizes = [1, 128], strides = [1, 1]} : vector<20x128xf32> to vector<1x128xf32>
    %130 = vector.shape_cast %129 : vector<1x128xf32> to vector<128xf32>
    %131 = vector.shape_cast %130 : vector<128xf32> to vector<1x128xf32>
    %132 = vector.broadcast %131 : vector<1x128xf32> to vector<8x128xf32>
    %133 = arith.mulf %128, %132 : vector<8x128xf32>
    %134 = arith.addf %122, %133 : vector<8x128xf32>
    %cst_25 = arith.constant 0.612372696 : f32
    %135 = vector.broadcast %cst_25 : f32 to vector<8x128xf32>
    %136 = arith.subf %0, %135 : vector<8x128xf32>
    %137 = arith.mulf %136, %136 : vector<8x128xf32>
    %cst_26 = arith.constant 0.000000e+00 : f32
    %138 = vector.broadcast %cst_26 : f32 to vector<8x128xf32>
    %139 = arith.subf %138, %137 : vector<8x128xf32>
    %140 = math.exp %139 : vector<8x128xf32>
    %141 = vector.extract_strided_slice %1 {offsets = [11, 0], sizes = [1, 128], strides = [1, 1]} : vector<20x128xf32> to vector<1x128xf32>
    %142 = vector.shape_cast %141 : vector<1x128xf32> to vector<128xf32>
    %143 = vector.shape_cast %142 : vector<128xf32> to vector<1x128xf32>
    %144 = vector.broadcast %143 : vector<1x128xf32> to vector<8x128xf32>
    %145 = arith.mulf %140, %144 : vector<8x128xf32>
    %146 = arith.addf %134, %145 : vector<8x128xf32>
    %cst_27 = arith.constant 1.02062106 : f32
    %147 = vector.broadcast %cst_27 : f32 to vector<8x128xf32>
    %148 = arith.subf %0, %147 : vector<8x128xf32>
    %149 = arith.mulf %148, %148 : vector<8x128xf32>
    %cst_28 = arith.constant 0.000000e+00 : f32
    %150 = vector.broadcast %cst_28 : f32 to vector<8x128xf32>
    %151 = arith.subf %150, %149 : vector<8x128xf32>
    %152 = math.exp %151 : vector<8x128xf32>
    %153 = vector.extract_strided_slice %1 {offsets = [12, 0], sizes = [1, 128], strides = [1, 1]} : vector<20x128xf32> to vector<1x128xf32>
    %154 = vector.shape_cast %153 : vector<1x128xf32> to vector<128xf32>
    %155 = vector.shape_cast %154 : vector<128xf32> to vector<1x128xf32>
    %156 = vector.broadcast %155 : vector<1x128xf32> to vector<8x128xf32>
    %157 = arith.mulf %152, %156 : vector<8x128xf32>
    %158 = arith.addf %146, %157 : vector<8x128xf32>
    %cst_29 = arith.constant 1.42886972 : f32
    %159 = vector.broadcast %cst_29 : f32 to vector<8x128xf32>
    %160 = arith.subf %0, %159 : vector<8x128xf32>
    %161 = arith.mulf %160, %160 : vector<8x128xf32>
    %cst_30 = arith.constant 0.000000e+00 : f32
    %162 = vector.broadcast %cst_30 : f32 to vector<8x128xf32>
    %163 = arith.subf %162, %161 : vector<8x128xf32>
    %164 = math.exp %163 : vector<8x128xf32>
    %165 = vector.extract_strided_slice %1 {offsets = [13, 0], sizes = [1, 128], strides = [1, 1]} : vector<20x128xf32> to vector<1x128xf32>
    %166 = vector.shape_cast %165 : vector<1x128xf32> to vector<128xf32>
    %167 = vector.shape_cast %166 : vector<128xf32> to vector<1x128xf32>
    %168 = vector.broadcast %167 : vector<1x128xf32> to vector<8x128xf32>
    %169 = arith.mulf %164, %168 : vector<8x128xf32>
    %170 = arith.addf %158, %169 : vector<8x128xf32>
    %cst_31 = arith.constant 1.83711803 : f32
    %171 = vector.broadcast %cst_31 : f32 to vector<8x128xf32>
    %172 = arith.subf %0, %171 : vector<8x128xf32>
    %173 = arith.mulf %172, %172 : vector<8x128xf32>
    %cst_32 = arith.constant 0.000000e+00 : f32
    %174 = vector.broadcast %cst_32 : f32 to vector<8x128xf32>
    %175 = arith.subf %174, %173 : vector<8x128xf32>
    %176 = math.exp %175 : vector<8x128xf32>
    %177 = vector.extract_strided_slice %1 {offsets = [14, 0], sizes = [1, 128], strides = [1, 1]} : vector<20x128xf32> to vector<1x128xf32>
    %178 = vector.shape_cast %177 : vector<1x128xf32> to vector<128xf32>
    %179 = vector.shape_cast %178 : vector<128xf32> to vector<1x128xf32>
    %180 = vector.broadcast %179 : vector<1x128xf32> to vector<8x128xf32>
    %181 = arith.mulf %176, %180 : vector<8x128xf32>
    %182 = arith.addf %170, %181 : vector<8x128xf32>
    %cst_33 = arith.constant 2.24536681 : f32
    %183 = vector.broadcast %cst_33 : f32 to vector<8x128xf32>
    %184 = arith.subf %0, %183 : vector<8x128xf32>
    %185 = arith.mulf %184, %184 : vector<8x128xf32>
    %cst_34 = arith.constant 0.000000e+00 : f32
    %186 = vector.broadcast %cst_34 : f32 to vector<8x128xf32>
    %187 = arith.subf %186, %185 : vector<8x128xf32>
    %188 = math.exp %187 : vector<8x128xf32>
    %189 = vector.extract_strided_slice %1 {offsets = [15, 0], sizes = [1, 128], strides = [1, 1]} : vector<20x128xf32> to vector<1x128xf32>
    %190 = vector.shape_cast %189 : vector<1x128xf32> to vector<128xf32>
    %191 = vector.shape_cast %190 : vector<128xf32> to vector<1x128xf32>
    %192 = vector.broadcast %191 : vector<1x128xf32> to vector<8x128xf32>
    %193 = arith.mulf %188, %192 : vector<8x128xf32>
    %194 = arith.addf %182, %193 : vector<8x128xf32>
    %cst_35 = arith.constant 2.653615 : f32
    %195 = vector.broadcast %cst_35 : f32 to vector<8x128xf32>
    %196 = arith.subf %0, %195 : vector<8x128xf32>
    %197 = arith.mulf %196, %196 : vector<8x128xf32>
    %cst_36 = arith.constant 0.000000e+00 : f32
    %198 = vector.broadcast %cst_36 : f32 to vector<8x128xf32>
    %199 = arith.subf %198, %197 : vector<8x128xf32>
    %200 = math.exp %199 : vector<8x128xf32>
    %201 = vector.extract_strided_slice %1 {offsets = [16, 0], sizes = [1, 128], strides = [1, 1]} : vector<20x128xf32> to vector<1x128xf32>
    %202 = vector.shape_cast %201 : vector<1x128xf32> to vector<128xf32>
    %203 = vector.shape_cast %202 : vector<128xf32> to vector<1x128xf32>
    %204 = vector.broadcast %203 : vector<1x128xf32> to vector<8x128xf32>
    %205 = arith.mulf %200, %204 : vector<8x128xf32>
    %206 = arith.addf %194, %205 : vector<8x128xf32>
    %cst_37 = arith.constant 3.06186342 : f32
    %207 = vector.broadcast %cst_37 : f32 to vector<8x128xf32>
    %208 = arith.subf %0, %207 : vector<8x128xf32>
    %209 = arith.mulf %208, %208 : vector<8x128xf32>
    %cst_38 = arith.constant 0.000000e+00 : f32
    %210 = vector.broadcast %cst_38 : f32 to vector<8x128xf32>
    %211 = arith.subf %210, %209 : vector<8x128xf32>
    %212 = math.exp %211 : vector<8x128xf32>
    %213 = vector.extract_strided_slice %1 {offsets = [17, 0], sizes = [1, 128], strides = [1, 1]} : vector<20x128xf32> to vector<1x128xf32>
    %214 = vector.shape_cast %213 : vector<1x128xf32> to vector<128xf32>
    %215 = vector.shape_cast %214 : vector<128xf32> to vector<1x128xf32>
    %216 = vector.broadcast %215 : vector<1x128xf32> to vector<8x128xf32>
    %217 = arith.mulf %212, %216 : vector<8x128xf32>
    %218 = arith.addf %206, %217 : vector<8x128xf32>
    %cst_39 = arith.constant 3.47011209 : f32
    %219 = vector.broadcast %cst_39 : f32 to vector<8x128xf32>
    %220 = arith.subf %0, %219 : vector<8x128xf32>
    %221 = arith.mulf %220, %220 : vector<8x128xf32>
    %cst_40 = arith.constant 0.000000e+00 : f32
    %222 = vector.broadcast %cst_40 : f32 to vector<8x128xf32>
    %223 = arith.subf %222, %221 : vector<8x128xf32>
    %224 = math.exp %223 : vector<8x128xf32>
    %225 = vector.extract_strided_slice %1 {offsets = [18, 0], sizes = [1, 128], strides = [1, 1]} : vector<20x128xf32> to vector<1x128xf32>
    %226 = vector.shape_cast %225 : vector<1x128xf32> to vector<128xf32>
    %227 = vector.shape_cast %226 : vector<128xf32> to vector<1x128xf32>
    %228 = vector.broadcast %227 : vector<1x128xf32> to vector<8x128xf32>
    %229 = arith.mulf %224, %228 : vector<8x128xf32>
    %230 = arith.addf %218, %229 : vector<8x128xf32>
    %cst_41 = arith.constant 3.87836027 : f32
    %231 = vector.broadcast %cst_41 : f32 to vector<8x128xf32>
    %232 = arith.subf %0, %231 : vector<8x128xf32>
    %233 = arith.mulf %232, %232 : vector<8x128xf32>
    %cst_42 = arith.constant 0.000000e+00 : f32
    %234 = vector.broadcast %cst_42 : f32 to vector<8x128xf32>
    %235 = arith.subf %234, %233 : vector<8x128xf32>
    %236 = math.exp %235 : vector<8x128xf32>
    %237 = vector.extract_strided_slice %1 {offsets = [19, 0], sizes = [1, 128], strides = [1, 1]} : vector<20x128xf32> to vector<1x128xf32>
    %238 = vector.shape_cast %237 : vector<1x128xf32> to vector<128xf32>
    %239 = vector.shape_cast %238 : vector<128xf32> to vector<1x128xf32>
    %240 = vector.broadcast %239 : vector<1x128xf32> to vector<8x128xf32>
    %241 = arith.mulf %236, %240 : vector<8x128xf32>
    %242 = arith.addf %230, %241 : vector<8x128xf32>
    %c0_43 = arith.constant 0 : index
    %c0_44 = arith.constant 0 : index
    %243 = vector.load %arg4[%c0_43, %c0_44] : memref<8x128xf32, #tpu.memory_space<vmem>>, vector<8x128xf32>
    tpu.vector_store %arg4[%c0_43, %c0_44], %242 {strides = array<i32>} : memref<8x128xf32, #tpu.memory_space<vmem>>, vector<8x128xf32>,
    return
  }
  func.func @transform_0(%arg0: i32, %arg1: i32) -> (i32, i32) {
    %c0_i32 = arith.constant 0 : i32
    return %arg0, %arg1 : i32, i32
  }
  func.func @transform_1(%arg0: i32, %arg1: i32) -> (i32, i32) {
    %c0_i32 = arith.constant 0 : i32
    %c0_i32_0 = arith.constant 0 : i32
    return %c0_i32, %arg1 : i32, i32
  }
  func.func @transform_2(%arg0: i32, %arg1: i32) -> (i32, i32) {
    %c0_i32 = arith.constant 0 : i32
    return %arg0, %arg1 : i32, i32
  }
}

</mosaic_0001>

<llo_original>
// kernel: tpu_custom_call.1
$region0: #{tpu_custom_call.1}
  #allocation0 [shape = 'u32[]', space=smem, size = 0x4, offset = 0x4, fixed_abs, tag = 'smem constant byte address 0x4 - core index']
  #allocation1 [shape = 'u32[72,128]{1,0:T(1,128)}', space=vmem, size = 0x9000, scoped, tag = 'internal scratch']
  %s0 = inlined_call_operand.hbm [shape: f32[8,128], index: 0, kind: input, shape index: {}]
  %s1 = inlined_call_operand.hbm [shape: f32[20,128], index: 1, kind: input, shape index: {}]
  %s2 = inlined_call_operand.hbm [shape: f32[8,128], index: 2, kind: output, shape index: {}]
  %s3 = sld [smem:[#allocation0]]
  $region26: #{tpu_custom_call.1} parent=0
    _
  %s5 = ssub.s32 1, %s3
  %s6 = scalar_select 0, %s5, %s3
  $region1: #{tpu_custom_call.1} parent=0
    #allocation2 [shape = 'u8[4096]{0}', space=vmem, size = 0x1000, scoped, tag = 'input window, operand 0, single buffered']
    #allocation3 [shape = 's32[1]{0}', space=sflag, size = 0x4, scoped, tag = 'scoped memory for tpu_custom_call.1']
    #allocation4 [shape = 's32[1]{0}', space=sflag, size = 0x4, scoped, tag = 'scoped memory for tpu_custom_call.1']
    #allocation5 [shape = 'u8[12288]{0}', space=vmem, size = 0x3000, scoped, tag = 'input window, operand 1, single buffered']
    #allocation6 [shape = 's32[1]{0}', space=sflag, size = 0x4, scoped, tag = 'scoped memory for tpu_custom_call.1']
    #allocation7 [shape = 'u8[4096]{0}', space=vmem, size = 0x1000, scoped, tag = 'output window, operand 0, single buffered']
    %7 = vsyncpa [#allocation3], 0
    %8 = vsyncpa [#allocation6], 0
    %9 = vsyncpa [#allocation4], 0
    // Predicated region
    $region2: #{tpu_custom_call.1} parent=1 // pred_check
      _
    $region3: #{tpu_custom_call.1} parent=1 // pred_check_branch
      %11 = sbr.rel (0) target = $region5
    $region4: #{tpu_custom_call.1} parent=1 // pred_region
      %13 = vsyncadd [#allocation3], 0
      %s15 = sshll.u32 %s0, 4
      %s16 = int_to_ptr.hbm [resolvable:$true] %s15
      %s17 = sshll.u32 [#allocation2], 4
      %s18 = int_to_ptr.vmem [resolvable:$true] %s17
      %20 = dma.hbm_to_vmem [thread:$0]  %s16, 128, %s18, [#allocation3]
    $region5: #{tpu_custom_call.1} parent=1 // pred_fallthru
      _
    // Predicated region
    $region6: #{tpu_custom_call.1} parent=1 // pred_check
      _
    $region7: #{tpu_custom_call.1} parent=1 // pred_check_branch
      %22 = sbr.rel (0) target = $region9
    $region8: #{tpu_custom_call.1} parent=1 // pred_region
      %24 = vsyncadd [#allocation6], 0
      %s25 = sshll.u32 %s1, 4
      %s26 = int_to_ptr.hbm [resolvable:$true] %s25
      %s27 = sshll.u32 [#allocation5], 4
      %s28 = int_to_ptr.vmem [resolvable:$true] %s27
      %33 = dma.hbm_to_vmem [thread:$0]  %s26, 384, %s28, [#allocation6], 128, 128, 8
    $region9: #{tpu_custom_call.1} parent=1 // pred_fallthru
      _
    // Predicated region
    $region10: #{tpu_custom_call.1} parent=1 // pred_check
      _
    $region11: #{tpu_custom_call.1} parent=1 // pred_check_branch
      %35 = sbr.rel (0) target = $region13
    $region12: #{tpu_custom_call.1} parent=1 // pred_region
      %37 = dma.done [#allocation3], 128
    $region13: #{tpu_custom_call.1} parent=1 // pred_fallthru
      _
    // Predicated region
    $region14: #{tpu_custom_call.1} parent=1 // pred_check
      _
    $region15: #{tpu_custom_call.1} parent=1 // pred_check_branch
      %39 = sbr.rel (0) target = $region17
    $region16: #{tpu_custom_call.1} parent=1 // pred_region
      %41 = dma.done [#allocation6], 384
    $region17: #{tpu_custom_call.1} parent=1 // pred_fallthru
      _
    %v42 = vld [vmem:[#allocation2] sm:$0xff]
    %v43 = vld [vmem:[#allocation5] sm:$0xff]
    %v44 = vld [vmem:[#allocation5 + $0x8] sm:$0xff]
    %v45 = vld [vmem:[#allocation5 + $0x10] sm:$0xf]
    %v46 = vsub.f32 %v42, -3.8783603
    %v47 = vmul.f32 %v46, %v46
    %v48 = vsub.f32 0.0, %v47
    %v49 = vmul.f32 %v48, 1.442695
    %v50 = vpow.pop %v49
    %v51 = vperm.slane %v43, 0
    %v52 = vmul.f32 %v50, %v51
    %v53 = vadd.f32 %v52, 0.0
    %v54 = vsub.f32 %v42, -3.470112
    %v55 = vmul.f32 %v54, %v54
    %v56 = vsub.f32 0.0, %v55
    %v57 = vmul.f32 %v56, 1.442695
    %v58 = vpow.pop %v57
    %v59 = vperm.slane %v43, 1
    %v60 = vmul.f32 %v58, %v59
    %v61 = vadd.f32 %v53, %v60
    %v62 = vsub.f32 %v42, -3.0618634
    %v63 = vmul.f32 %v62, %v62
    %v64 = vsub.f32 0.0, %v63
    %v65 = vmul.f32 %v64, 1.442695
    %v66 = vpow.pop %v65
    %v67 = vperm.slane %v43, 2
    %v68 = vmul.f32 %v66, %v67
    %v69 = vadd.f32 %v61, %v68
    %v70 = vsub.f32 %v42, -2.653615
    %v71 = vmul.f32 %v70, %v70
    %v72 = vsub.f32 0.0, %v71
    %v73 = vmul.f32 %v72, 1.442695
    %v74 = vpow.pop %v73
    %v75 = vperm.slane %v43, 3
    %v76 = vmul.f32 %v74, %v75
    %v77 = vadd.f32 %v69, %v76
    %v78 = vsub.f32 %v42, -2.2453663
    %v79 = vmul.f32 %v78, %v78
    %v80 = vsub.f32 0.0, %v79
    %v81 = vmul.f32 %v80, 1.442695
    %v82 = vpow.pop %v81
    %v83 = vperm.slane %v43, 4
    %v84 = vmul.f32 %v82, %v83
    %v85 = vadd.f32 %v77, %v84
    %v86 = vsub.f32 %v42, -1.837118
    %v87 = vmul.f32 %v86, %v86
    %v88 = vsub.f32 0.0, %v87
    %v89 = vmul.f32 %v88, 1.442695
    %v90 = vpow.pop %v89
    %v91 = vperm.slane %v43, 5
    %v92 = vmul.f32 %v90, %v91
    %v93 = vadd.f32 %v85, %v92
    %v94 = vsub.f32 %v42, -1.4288697
    %v95 = vmul.f32 %v94, %v94
    %v96 = vsub.f32 0.0, %v95
    %v97 = vmul.f32 %v96, 1.442695
    %v98 = vpow.pop %v97
    %v99 = vperm.slane %v43, 6
    %v100 = vmul.f32 %v98, %v99
    %v101 = vadd.f32 %v93, %v100
    %v102 = vsub.f32 %v42, -1.0206211
    %v103 = vmul.f32 %v102, %v102
    %v104 = vsub.f32 0.0, %v103
    %v105 = vmul.f32 %v104, 1.442695
    %v106 = vpow.pop %v105
    %v107 = vperm.slane %v43, 7
    %v108 = vmul.f32 %v106, %v107
    %v109 = vadd.f32 %v101, %v108
    %v110 = vsub.f32 %v42, -0.6123727
    %v111 = vmul.f32 %v110, %v110
    %v112 = vsub.f32 0.0, %v111
    %v113 = vmul.f32 %v112, 1.442695
    %v114 = vpow.pop %v113
    %v115 = vperm.slane %v44, 0
    %v116 = vmul.f32 %v114, %v115
    %v117 = vadd.f32 %v109, %v116
    %v118 = vsub.f32 %v42, -0.20412429
    %v119 = vmul.f32 %v118, %v118
    %v120 = vsub.f32 0.0, %v119
    %v121 = vmul.f32 %v120, 1.442695
    %v122 = vpow.pop %v121
    %v123 = vperm.slane %v44, 1
    %v124 = vmul.f32 %v122, %v123
    %v125 = vadd.f32 %v117, %v124
    %v126 = vsub.f32 %v42, 0.20412432
    %v127 = vmul.f32 %v126, %v126
    %v128 = vsub.f32 0.0, %v127
    %v129 = vmul.f32 %v128, 1.442695
    %v130 = vpow.pop %v129
    %v131 = vperm.slane %v44, 2
    %v132 = vmul.f32 %v130, %v131
    %v133 = vadd.f32 %v125, %v132
    %v134 = vsub.f32 %v42, 0.6123727
    %v135 = vmul.f32 %v134, %v134
    %v136 = vsub.f32 0.0, %v135
    %v137 = vmul.f32 %v136, 1.442695
    %v138 = vpow.pop %v137
    %v139 = vperm.slane %v44, 3
    %v140 = vmul.f32 %v138, %v139
    %v141 = vadd.f32 %v133, %v140
    %v142 = vsub.f32 %v42, 1.0206211
    %v143 = vmul.f32 %v142, %v142
    %v144 = vsub.f32 0.0, %v143
    %v145 = vmul.f32 %v144, 1.442695
    %v146 = vpow.pop %v145
    %v147 = vperm.slane %v44, 4
    %v148 = vmul.f32 %v146, %v147
    %v149 = vadd.f32 %v141, %v148
    %v150 = vsub.f32 %v42, 1.4288697
    %v151 = vmul.f32 %v150, %v150
    %v152 = vsub.f32 0.0, %v151
    %v153 = vmul.f32 %v152, 1.442695
    %v154 = vpow.pop %v153
    %v155 = vperm.slane %v44, 5
    %v156 = vmul.f32 %v154, %v155
    %v157 = vadd.f32 %v149, %v156
    %v158 = vsub.f32 %v42, 1.837118
    %v159 = vmul.f32 %v158, %v158
    %v160 = vsub.f32 0.0, %v159
    %v161 = vmul.f32 %v160, 1.442695
    %v162 = vpow.pop %v161
    %v163 = vperm.slane %v44, 6
    %v164 = vmul.f32 %v162, %v163
    %v165 = vadd.f32 %v157, %v164
    %v166 = vsub.f32 %v42, 2.2453668
    %v167 = vmul.f32 %v166, %v166
    %v168 = vsub.f32 0.0, %v167
    %v169 = vmul.f32 %v168, 1.442695
    %v170 = vpow.pop %v169
    %v171 = vperm.slane %v44, 7
    %v172 = vmul.f32 %v170, %v171
    %v173 = vadd.f32 %v165, %v172
    %v174 = vsub.f32 %v42, 2.653615
    %v175 = vmul.f32 %v174, %v174
    %v176 = vsub.f32 0.0, %v175
    %v177 = vmul.f32 %v176, 1.442695
    %v178 = vpow.pop %v177
    %v179 = vperm.slane %v45, 0
    %v180 = vmul.f32 %v178, %v179
    %v181 = vadd.f32 %v173, %v180
    %v182 = vsub.f32 %v42, 3.0618634
    %v183 = vmul.f32 %v182, %v182
    %v184 = vsub.f32 0.0, %v183
    %v185 = vmul.f32 %v184, 1.442695
    %v186 = vpow.pop %v185
    %v187 = vperm.slane %v45, 1
    %v188 = vmul.f32 %v186, %v187
    %v189 = vadd.f32 %v181, %v188
    %v190 = vsub.f32 %v42, 3.470112
    %v191 = vmul.f32 %v190, %v190
    %v192 = vsub.f32 0.0, %v191
    %v193 = vmul.f32 %v192, 1.442695
    %v194 = vpow.pop %v193
    %v195 = vperm.slane %v45, 2
    %v196 = vmul.f32 %v194, %v195
    %v197 = vadd.f32 %v189, %v196
    %v198 = vsub.f32 %v42, 3.8783603
    %v199 = vmul.f32 %v198, %v198
    %v200 = vsub.f32 0.0, %v199
    %v201 = vmul.f32 %v200, 1.442695
    %v202 = vpow.pop %v201
    %v203 = vperm.slane %v45, 3
    %v204 = vmul.f32 %v202, %v203
    %v205 = vadd.f32 %v197, %v204
    %206 = vst [vmem:[#allocation7] sm:$0xff] %v205
    // Predicated region
    $region18: #{tpu_custom_call.1} parent=1 // pred_check
      _
    $region19: #{tpu_custom_call.1} parent=1 // pred_check_branch
      %208 = sbr.rel (0) target = $region21
    $region20: #{tpu_custom_call.1} parent=1 // pred_region
      %210 = vsyncadd [#allocation4], 0
      %s212 = sshll.u32 [#allocation7], 4
      %s213 = int_to_ptr.vmem [resolvable:$true] %s212
      %s214 = sshll.u32 %s2, 4
      %s215 = int_to_ptr.hbm [resolvable:$true] %s214
      %217 = dma.vmem_to_hbm [thread:$0]  %s213, 128, %s215, [#allocation4]
    $region21: #{tpu_custom_call.1} parent=1 // pred_fallthru
      _
    // Predicated region
    $region22: #{tpu_custom_call.1} parent=1 // pred_check
      _
    $region23: #{tpu_custom_call.1} parent=1 // pred_check_branch
      %219 = sbr.rel (0) target = $region25
    $region24: #{tpu_custom_call.1} parent=1 // pred_region
      %221 = dma.done [#allocation4], 128
    $region25: #{tpu_custom_call.1} parent=1 // pred_fallthru
      _
    %222 = vsyncpa [#allocation3], 1
    %223 = vsyncpa [#allocation6], 1
    %224 = vsyncpa [#allocation4], 1

</llo_original>
